<compile_context>
chip_gen: v5e
topology: v5e:2x2
jax: 0.10.0
libtpu: 0.0.40
codegen_flags: <defaults>
</compile_context>

<pallas_src>
import jax
import jax.numpy as jnp
from jax.experimental import pallas as pl
from jax.experimental.pallas import tpu as pltpu


# -------------------- kernel --------------------

def fused_affine_kernel(x_ref, w_ref, b_ref, o_ref):
    # x_ref: (TILE_B, 10)  w_ref: (10, 40)  b_ref: (1, 40)  o_ref: (TILE_B, 40)
    o_ref[...] = (
        jnp.dot(x_ref[...], w_ref[...], preferred_element_type=jnp.float32)
        + b_ref[...]
    ).astype(o_ref.dtype)


# -------------------- wrapper --------------------

def _round_up(n, m):
    return ((n + m - 1) // m) * m


def fuse_params(params):
    """Fold the 4-layer affine chain into one (10,40) weight + (40,) bias.

    Done once outside the per-call path (no per-call transposes/reshapes).
    PyTorch stores W as (out, in); we work with W.T = (in, out).
    """
    wa = params["wA"].T   # (10, 20)
    ws = params["wS"].T   # (20, 20)
    wb = params["wB"].T   # (20, 30)
    wc = params["wC"].T   # (30, 40)

    w_total = wa @ ws @ wb @ wc                       # (10, 40)
    b = params["bA"] @ ws + params["bS"]              # (20,)
    b = b @ wb + params["bB"]                         # (30,)
    b = b @ wc + params["bC"]                         # (40,)
    return w_total, b[None, :]                        # (10, 40), (1, 40)


@jax.jit
def model_forward(x, w_total, b_total):
    """x: (B, 10) f32; w_total: (10, 40); b_total: (1, 40) -> (B, 40)."""
    B = x.shape[0]
    D_IN = w_total.shape[0]
    D_OUT = w_total.shape[1]

    # Batch tile: multiple of 8 sublanes; cap at 1024 rows (~1 MiB of
    # activations per tile, well under the scoped VMEM limit on every
    # generation, including v7x's 64 MiB VMEM).
    tile_b = min(1024, _round_up(B, 8))
    grid = (pl.cdiv(B, tile_b),)

    return pl.pallas_call(
        fused_affine_kernel,
        out_shape=jax.ShapeDtypeStruct((B, D_OUT), jnp.float32),
        grid_spec=pltpu.PrefetchScalarGridSpec(
            num_scalar_prefetch=0,
            grid=grid,
            in_specs=[
                pl.BlockSpec((tile_b, D_IN), lambda i: (i, 0)),   # activations tiled over batch
                pl.BlockSpec((D_IN, D_OUT), lambda i: (0, 0)),    # weights: VMEM-resident
                pl.BlockSpec((1, D_OUT), lambda i: (0, 0)),       # bias: VMEM-resident
            ],
            out_specs=pl.BlockSpec((tile_b, D_OUT), lambda i: (i, 0)),
        ),
        compiler_params=pltpu.CompilerParams(
            dimension_semantics=("parallel",),   # shard batch across TCs on v7x
        ),
        cost_estimate=pl.CostEstimate(
            flops=2 * B * D_IN * D_OUT,
            transcendentals=0,
            bytes_accessed=(B * D_IN + B * D_OUT + D_IN * D_OUT + D_OUT) * 4,
        ),
    )(x, w_total, b_total)


# -------------------- params / reference --------------------

def make_params(key):
    """Deterministic init mimicking nn.Linear's shapes: W is (out, in)."""
    def linear(k, out_f, in_f):
        k1, k2 = jax.random.split(k)
        bound = 1.0 / (in_f ** 0.5)
        w = jax.random.uniform(k1, (out_f, in_f), jnp.float32, -bound, bound)
        b = jax.random.uniform(k2, (out_f,), jnp.float32, -bound, bound)
        return w, b

    ks = jax.random.split(key, 4)
    wA, bA = linear(ks[0], 20, 10)
    wS, bS = linear(ks[1], 20, 20)
    wB, bB = linear(ks[2], 30, 20)
    wC, bC = linear(ks[3], 40, 30)
    return {"wA": wA, "bA": bA, "wS": wS, "bS": bS,
            "wB": wB, "bB": bB, "wC": wC, "bC": bC}


def reference_forward(x, p):
    # Unfused 4-layer chain, exactly as the PyTorch module computes it.
    h = x @ p["wA"].T + p["bA"]
    h = h @ p["wS"].T + p["bS"]
    h = h @ p["wB"].T + p["bB"]
    h = h @ p["wC"].T + p["bC"]
    return h


# -------------------- test --------------------

if __name__ == "__main__":
    key = jax.random.PRNGKey(0)
    kx, kp = jax.random.split(key)
    batch = 8
    x = jax.random.normal(kx, (batch, 10), jnp.float32)
    params = make_params(kp)

    # One-time param fusion (would live at init time in a real model).
    w_total, b_total = fuse_params(params)
    w_total = jax.block_until_ready(w_total)

    out = model_forward(x, w_total, b_total)
    out = jax.block_until_ready(out)

    ref = reference_forward(x, params)
    assert out.shape == (batch, 40), out.shape
    # Affine fusion reorders rounding slightly; comfortably within 1e-4.
    assert jnp.allclose(out, ref, atol=1e-4, rtol=1e-4), \
        float(jnp.max(jnp.abs(out - ref)))

    print("KERNEL_OK")
</pallas_src>

<mosaic_0001>
module attributes {stable_mosaic.version = 11 : i64} {
  func.func @fused_affine_kernel(%arg0: i32, %arg1: memref<8x10xf32, #tpu.memory_space<vmem>>, %arg2: memref<10x40xf32, #tpu.memory_space<vmem>>, %arg3: memref<1x40xf32, #tpu.memory_space<vmem>>, %arg4: memref<8x40xf32, #tpu.memory_space<vmem>>) attributes {dimension_semantics = [#tpu.dimension_semantics<parallel>], iteration_bounds = array<i64: 1>, scalar_prefetch = 0 : i64, scratch_operands = 0 : i64, tpu.core_type = #tpu.core_type<tc>, window_params = [{transform_indices = @transform_0, window_bounds = array<i64: 8, 10>}, {pipeline_mode = #tpu.pipeline_mode<synchronous>, transform_indices = @transform_1, window_bounds = array<i64: 10, 40>}, {pipeline_mode = #tpu.pipeline_mode<synchronous>, transform_indices = @transform_2, window_bounds = array<i64: 1, 40>}, {transform_indices = @transform_3, window_bounds = array<i64: 8, 40>}]} {
    %c0 = arith.constant 0 : index
    %c0_0 = arith.constant 0 : index
    %0 = vector.load %arg1[%c0, %c0_0] : memref<8x10xf32, #tpu.memory_space<vmem>>, vector<8x10xf32>
    %c0_1 = arith.constant 0 : index
    %c0_2 = arith.constant 0 : index
    %1 = vector.load %arg2[%c0_1, %c0_2] : memref<10x40xf32, #tpu.memory_space<vmem>>, vector<10x40xf32>
    %cst = arith.constant dense<0.000000e+00> : vector<8x40xf32>
    %2 = tpu.matmul %0, %1, %cst {dimension_numbers = #tpu.dot_dimension_numbers<[1], [0], [0], [1], [0, 0, 1, 1], [], []>} : vector<8x10xf32>, vector<10x40xf32>, vector<8x40xf32> -> vector<8x40xf32>
    %c0_3 = arith.constant 0 : index
    %c0_4 = arith.constant 0 : index
    %3 = vector.load %arg3[%c0_3, %c0_4] : memref<1x40xf32, #tpu.memory_space<vmem>>, vector<1x40xf32>
    %4 = vector.broadcast %3 : vector<1x40xf32> to vector<8x40xf32>
    %5 = arith.addf %2, %4 : vector<8x40xf32>
    %c0_5 = arith.constant 0 : index
    %c0_6 = arith.constant 0 : index
    %6 = vector.load %arg4[%c0_5, %c0_6] : memref<8x40xf32, #tpu.memory_space<vmem>>, vector<8x40xf32>
    tpu.vector_store %arg4[%c0_5, %c0_6], %5 {strides = array<i32>} : memref<8x40xf32, #tpu.memory_space<vmem>>, vector<8x40xf32>,
    return
  }
  func.func @transform_0(%arg0: i32) -> (i32, i32) {
    %c0_i32 = arith.constant 0 : i32
    %c0_i32_0 = arith.constant 0 : i32
    return %arg0, %c0_i32 : i32, i32
  }
  func.func @transform_1(%arg0: i32) -> (i32, i32) {
    %c0_i32 = arith.constant 0 : i32
    %c0_i32_0 = arith.constant 0 : i32
    %c0_i32_1 = arith.constant 0 : i32
    return %c0_i32, %c0_i32_0 : i32, i32
  }
  func.func @transform_2(%arg0: i32) -> (i32, i32) {
    %c0_i32 = arith.constant 0 : i32
    %c0_i32_0 = arith.constant 0 : i32
    %c0_i32_1 = arith.constant 0 : i32
    return %c0_i32, %c0_i32_0 : i32, i32
  }
  func.func @transform_3(%arg0: i32) -> (i32, i32) {
    %c0_i32 = arith.constant 0 : i32
    %c0_i32_0 = arith.constant 0 : i32
    return %arg0, %c0_i32 : i32, i32
  }
}

</mosaic_0001>

<llo_original>
// kernel: model_forward.1
$region0: #{model_forward.1}
  #allocation0 [shape = 'u32[]', space=smem, size = 0x4, offset = 0x4, fixed_abs, tag = 'smem constant byte address 0x4 - core index']
  #allocation1 [shape = 'u32[72,128]{1,0:T(1,128)}', space=vmem, size = 0x9000, scoped, tag = 'internal scratch']
  %s0 = inlined_call_operand.hbm [shape: f32[8,10], index: 0, kind: input, shape index: {}]
  %s1 = inlined_call_operand.hbm [shape: f32[10,40], index: 1, kind: input, shape index: {}]
  %s2 = inlined_call_operand.vmem [shape: f32[1,40], index: 2, kind: input, shape index: {}]
  %s3 = inlined_call_operand.hbm [shape: f32[8,40], index: 3, kind: output, shape index: {}]
  %s4 = sld [smem:[#allocation0]]
  $region30: #{model_forward.1} parent=0
    _
  %s6 = ssub.s32 1, %s4
  %s7 = scalar_select 0, %s6, %s4
  $region1: #{model_forward.1} parent=0
    #allocation2 [shape = 'u8[4096]{0}', space=vmem, size = 0x1000, scoped, tag = 'input window, operand 0, single buffered']
    #allocation3 [shape = 's32[1]{0}', space=sflag, size = 0x4, scoped, tag = 'scoped memory for model_forward.1']
    #allocation4 [shape = 's32[1]{0}', space=sflag, size = 0x4, scoped, tag = 'scoped memory for model_forward.1']
    #allocation5 [shape = 'u8[8192]{0}', space=vmem, size = 0x2000, scoped, tag = 'input window, operand 1, single buffered']
    #allocation6 [shape = 's32[1]{0}', space=sflag, size = 0x4, scoped, tag = 'scoped memory for model_forward.1']
    #allocation7 [shape = 'u8[4096]{0}', space=vmem, size = 0x1000, scoped, tag = 'output window, operand 0, single buffered']
    %8 = vsyncpa [#allocation3], 0
    %9 = vsyncpa [#allocation6], 0
    %10 = vsyncpa [#allocation4], 0
    // Predicated region
    $region2: #{model_forward.1} parent=1 // pred_check
      _
    $region3: #{model_forward.1} parent=1 // pred_check_branch
      %12 = sbr.rel (0) target = $region5
    $region4: #{model_forward.1} parent=1 // pred_region
      %14 = vsyncadd [#allocation3], 0
      %s16 = sshll.u32 %s0, 4
      %s17 = int_to_ptr.hbm [resolvable:$true] %s16
      %s18 = sshll.u32 [#allocation2], 4
      %s19 = int_to_ptr.vmem [resolvable:$true] %s18
      %21 = dma.hbm_to_vmem [thread:$0]  %s17, 128, %s19, [#allocation3]
    $region5: #{model_forward.1} parent=1 // pred_fallthru
      _
    // Predicated region
    $region6: #{model_forward.1} parent=1 // pred_check
      _
    $region7: #{model_forward.1} parent=1 // pred_check_branch
      %23 = sbr.rel (0) target = $region9
    $region8: #{model_forward.1} parent=1 // pred_region
      %25 = vsyncadd [#allocation6], 0
      %s26 = sshll.u32 %s1, 4
      %s27 = int_to_ptr.hbm [resolvable:$true] %s26
      %s28 = sshll.u32 [#allocation5], 4
      %s29 = int_to_ptr.vmem [resolvable:$true] %s28
      %34 = dma.hbm_to_vmem [thread:$0]  %s27, 256, %s29, [#allocation6], 128, 128, 8
    $region9: #{model_forward.1} parent=1 // pred_fallthru
      _
    // Predicated region
    $region10: #{model_forward.1} parent=1 // pred_check
      _
    $region11: #{model_forward.1} parent=1 // pred_check_branch
      %36 = sbr.rel (0) target = $region13
    $region12: #{model_forward.1} parent=1 // pred_region
      _
    $region13: #{model_forward.1} parent=1 // pred_fallthru
      _
    // Predicated region
    $region14: #{model_forward.1} parent=1 // pred_check
      _
    $region15: #{model_forward.1} parent=1 // pred_check_branch
      %38 = sbr.rel (0) target = $region17
    $region16: #{model_forward.1} parent=1 // pred_region
      %40 = dma.done [#allocation3], 128
    $region17: #{model_forward.1} parent=1 // pred_fallthru
      _
    // Predicated region
    $region18: #{model_forward.1} parent=1 // pred_check
      _
    $region19: #{model_forward.1} parent=1 // pred_check_branch
      %42 = sbr.rel (0) target = $region21
    $region20: #{model_forward.1} parent=1 // pred_region
      %44 = dma.done [#allocation6], 256
    $region21: #{model_forward.1} parent=1 // pred_fallthru
      _
    %v45 = vld [vmem:[#allocation2] sm:$0xff]
    %v46 = vld [vmem:[#allocation5] sm:$0xff]
    %v47 = vld [vmem:[#allocation5 + $0x8] sm:$0x3]
    %v48 = vld [vmem:[%s2] sm:$0x1]
    %v50 = vperm.slane %v48, 0
    %vm52 = vcmask 80896
    %v54 = vsel %vm52, %v45, 0
    %vm56 = vcmask 1041408
    %v58 = vsel %vm56, %v47, 0
    %60 = vmatpush.msra.mxu0 0.0
    %61 = vmatpush.msra.mxu0 0.0
    %62 = vmatpush.msra.mxu0 0.0
    %63 = vmatpush.msra.mxu0 0.0
    %64 = vmatpush.msra.mxu0 0.0
    %65 = vmatpush.msra.mxu0 0.0
    %66 = vmatpush.msra.mxu0 0.0
    %67 = vmatpush.msra.mxu0 0.0
    %68 = vmatpush.msra.mxu0 0.0
    %69 = vmatpush.msra.mxu0 0.0
    %70 = vmatpush.msra.mxu0 0.0
    %71 = vmatpush.msra.mxu0 0.0
    %72 = vmatpush.msra.mxu0 0.0
    %73 = vmatpush.msra.mxu0 0.0
    %74 = vmatpush.msra.mxu0 %v58
    %75 = vmatpush.msra.mxu0 %v46
    %76 = vmatmul.f32.gmra.mxu0 %v54
    %v77 = vpop.f32.mrf.mxu0
    %v78 = vadd.f32 %v50, %v77
    %79 = vdwg.mxu0
    %vm80 = vcmask 326656
    %81 = vst.msk [vmem:[#allocation7] sm:$0xff] %vm80, %v78
    // Predicated region
    $region22: #{model_forward.1} parent=1 // pred_check
      _
    $region23: #{model_forward.1} parent=1 // pred_check_branch
      %83 = sbr.rel (0) target = $region25
    $region24: #{model_forward.1} parent=1 // pred_region
      %85 = vsyncadd [#allocation4], 0
      %s87 = sshll.u32 [#allocation7], 4
      %s88 = int_to_ptr.vmem [resolvable:$true] %s87
      %s89 = sshll.u32 %s3, 4
      %s90 = int_to_ptr.hbm [resolvable:$true] %s89
      %92 = dma.vmem_to_hbm [thread:$0]  %s88, 128, %s90, [#allocation4]
    $region25: #{model_forward.1} parent=1 // pred_fallthru
      _
    // Predicated region
    $region26: #{model_forward.1} parent=1 // pred_check
      _
    $region27: #{model_forward.1} parent=1 // pred_check_branch
      %94 = sbr.rel (0) target = $region29
    $region28: #{model_forward.1} parent=1 // pred_region
      %96 = dma.done [#allocation4], 128
    $region29: #{model_forward.1} parent=1 // pred_fallthru
      _
    %97 = vsyncpa [#allocation3], 1
    %98 = vsyncpa [#allocation6], 1
    %99 = vsyncpa [#allocation4], 1

</llo_original>
